<compile_context>
chip_gen: v7x
topology: tpu7x:2x2x1
jax: 0.10.0
libtpu: 0.0.40
codegen_flags: <defaults>
</compile_context>

<pallas_src>
import math

import jax
import jax.numpy as jnp
from jax.experimental import pallas as pl
from jax.experimental.pallas import tpu as pltpu


def _round_up(x, m):
    return ((x + m - 1) // m) * m


def _cdiv(a, b):
    return -(-a // b)


def _tpu_vmem_and_cores():
    """(VMEM bytes per TensorCore, TensorCores per chip), with safe fallbacks."""
    vmem = 128 << 20
    try:
        vmem = int(pltpu.get_tpu_info().vmem_capacity_bytes)
    except Exception:
        pass
    # v7x: 64 MiB VMEM per TC, 2 TCs per chip.  v5e / v6e: 128 MiB, 1 TC.
    n_cores = 2 if vmem <= (64 << 20) else 1
    return vmem, n_cores


def _onedim_attn_kernel(q_ref, k_ref, v_ref, w_ref, b_ref, o_ref):
    # q_ref/k_ref: (tm, in_size); v_ref/o_ref: (tm, out_size)
    # w_ref: (in_size, out_size), pre-scaled by 1/sqrt(in_size); b_ref: (1, out_size)
    attn = q_ref[...] * k_ref[...]                                     # (tm, in)
    y = jnp.dot(attn, w_ref[...], preferred_element_type=jnp.float32)  # MXU
    y = y + b_ref[...].astype(jnp.float32)                             # (tm, out)
    # numerically-stable softmax over the (full, unpadded) last dim
    y = y - jnp.max(y, axis=-1, keepdims=True)
    e = jnp.exp(y)
    d = jnp.sum(e, axis=-1, keepdims=True)
    inv = pl.reciprocal(d, approx=True)        # EUP slot (cheap)
    inv = inv * (2.0 - d * inv)                # one Newton step -> near-exact
    o_ref[...] = (e * inv * v_ref[...].astype(jnp.float32)).astype(o_ref.dtype)


def prepare_params(weight, bias):
    """Hoist the per-call weight transform out of the hot path (call once at init).

    weight: (out_size, in_size) torch-style Linear weight; bias: (out_size,).
    Returns (W^T * 1/sqrt(in_size), bias[None, :]).
    """
    in_size = weight.shape[1]
    scale = jnp.asarray(1.0 / math.sqrt(float(in_size)), weight.dtype)
    return weight.T * scale, bias.reshape(1, -1)


def onedim_attention(q, k, v, w_scaled_t, bias_row, *, tm=None,
                     vmem_budget_bytes=None):
    """q, k: (..., in_size); v: (..., out_size); params from prepare_params()."""
    in_size = q.shape[-1]
    out_size = v.shape[-1]
    lead = q.shape[:-1]
    M = int(math.prod(lead)) if lead else 1
    out_dtype = v.dtype

    q2 = q.reshape(M, in_size)
    k2 = k.reshape(M, in_size)
    v2 = v.reshape(M, out_size)

    vmem_cap, n_cores = _tpu_vmem_and_cores()

    # dtype-dependent sublane multiple: 8 (f32) / 16 (bf16) / 32 (int8/fp8)
    min_itemsize = min(jnp.dtype(t).itemsize for t in
                       (q2.dtype, k2.dtype, v2.dtype, out_dtype))
    sub = max(8, 32 // max(min_itemsize, 1))

    in_b = jnp.dtype(q2.dtype).itemsize
    v_b = jnp.dtype(v2.dtype).itemsize
    o_b = jnp.dtype(out_dtype).itemsize
    w_b = jnp.dtype(w_scaled_t.dtype).itemsize
    w_bytes = (in_size * out_size + out_size) * w_b                    # resident W + bias
    # double-buffered streaming tiles (native dtype) + f32 compute temporaries
    per_row = (2 * (2 * in_size * in_b + out_size * (v_b + o_b))
               + 4 * (in_size + 3 * out_size))

    if vmem_budget_bytes is None:
        vmem_budget_bytes = min(vmem_cap // 2, 32 << 20)

    if tm is None:
        budget = max(vmem_budget_bytes - 2 * w_bytes, per_row * sub)
        tm = min(budget // per_row, 1024)
        tm = max((tm // sub) * sub, sub)
        tm = min(tm, _round_up(M, sub))          # no point tiling past M
        if n_cores > 1:
            # keep the grid-step count a multiple of the TC count so both v7x
            # TensorCores get balanced work (only matters when steps are few)
            steps = _cdiv(M, tm)
            if steps < 8 and steps % n_cores != 0:
                steps = _round_up(max(steps, n_cores), n_cores)
                tm = max(_round_up(_cdiv(M, steps), sub), sub)

    grid = (_cdiv(M, tm),)

    vmem_need = tm * per_row + 2 * w_bytes
    vmem_limit = int(min(max(vmem_need + (8 << 20), 32 << 20),
                         vmem_cap - (16 << 20)))

    # tiny tiles can't hide DMA latency behind double buffering -> 3 buffers
    stream_mode = pl.Buffered(3) if (tm <= 64 and grid[0] >= 4) else None

    def _spec(shape, index_map):
        if stream_mode is not None:
            return pl.BlockSpec(shape, index_map, pipeline_mode=stream_mode)
        return pl.BlockSpec(shape, index_map)

    out = pl.pallas_call(
        _onedim_attn_kernel,
        out_shape=jax.ShapeDtypeStruct((M, out_size), out_dtype),
        grid_spec=pltpu.PrefetchScalarGridSpec(
            num_scalar_prefetch=0,
            grid=grid,
            in_specs=[
                _spec((tm, in_size), lambda i: (i, 0)),                # q
                _spec((tm, in_size), lambda i: (i, 0)),                # k
                _spec((tm, out_size), lambda i: (i, 0)),               # v (unpadded)
                pl.BlockSpec((in_size, out_size), lambda i: (0, 0)),   # scaled W^T (resident)
                pl.BlockSpec((1, out_size), lambda i: (0, 0)),         # bias (resident)
            ],
            out_specs=pl.BlockSpec((tm, out_size), lambda i: (i, 0)),
        ),
        compiler_params=pltpu.CompilerParams(
            dimension_semantics=("parallel",),
            vmem_limit_bytes=vmem_limit),
    )(q2, k2, v2, w_scaled_t, bias_row)

    return out.reshape(*lead, out_size)


def _reference(q, k, v, weight, bias, in_size):
    attn = (q * k) / jnp.sqrt(jnp.float32(in_size))
    attn = attn @ weight.T + bias
    return jax.nn.softmax(attn, axis=-1) * v


if __name__ == "__main__":
    in_size, out_size = 32, 64
    batch, seq = 2, 8            # M = 16 rows

    key = jax.random.PRNGKey(0)
    kq, kk, kv, kw, kb = jax.random.split(key, 5)

    q = jax.random.normal(kq, (batch, seq, in_size), dtype=jnp.float32)
    k = jax.random.normal(kk, (batch, seq, in_size), dtype=jnp.float32)
    v = jax.random.normal(kv, (batch, seq, out_size), dtype=jnp.float32)

    # deterministic nn.Linear(in_size, out_size) params (synthetic init)
    bound = 1.0 / (in_size ** 0.5)
    weight = jax.random.uniform(kw, (out_size, in_size),
                                minval=-bound, maxval=bound, dtype=jnp.float32)
    bias = jax.random.uniform(kb, (out_size,),
                              minval=-bound, maxval=bound, dtype=jnp.float32)

    w_scaled_t, bias_row = prepare_params(weight, bias)   # once, at "init"

    out = onedim_attention(q, k, v, w_scaled_t, bias_row)
    out = jax.block_until_ready(out)

    ref = _reference(q, k, v, weight, bias, in_size)
    assert out.shape == (batch, seq, out_size)
    err = float(jnp.max(jnp.abs(out - ref)))
    assert jnp.allclose(out, ref, atol=1e-4, rtol=1e-4), err

    print("KERNEL_OK")
</pallas_src>

<mosaic_0001>
module attributes {stable_mosaic.version = 11 : i64} {
  func.func @_onedim_attn_kernel(%arg0: i32, %arg1: memref<16x32xf32, #tpu.memory_space<vmem>>, %arg2: memref<16x32xf32, #tpu.memory_space<vmem>>, %arg3: memref<16x64xf32, #tpu.memory_space<vmem>>, %arg4: memref<32x64xf32, #tpu.memory_space<vmem>>, %arg5: memref<1x64xf32, #tpu.memory_space<vmem>>, %arg6: memref<16x64xf32, #tpu.memory_space<vmem>>) attributes {dimension_semantics = [#tpu.dimension_semantics<parallel>], iteration_bounds = array<i64: 1>, scalar_prefetch = 0 : i64, scratch_operands = 0 : i64, tpu.core_type = #tpu.core_type<tc>, window_params = [{transform_indices = @transform_0, window_bounds = array<i64: 16, 32>}, {transform_indices = @transform_1, window_bounds = array<i64: 16, 32>}, {transform_indices = @transform_2, window_bounds = array<i64: 16, 64>}, {pipeline_mode = #tpu.pipeline_mode<synchronous>, transform_indices = @transform_3, window_bounds = array<i64: 32, 64>}, {pipeline_mode = #tpu.pipeline_mode<synchronous>, transform_indices = @transform_4, window_bounds = array<i64: 1, 64>}, {transform_indices = @transform_5, window_bounds = array<i64: 16, 64>}]} {
    %c0 = arith.constant 0 : index
    %c0_0 = arith.constant 0 : index
    %0 = vector.load %arg1[%c0, %c0_0] : memref<16x32xf32, #tpu.memory_space<vmem>>, vector<16x32xf32>
    %c0_1 = arith.constant 0 : index
    %c0_2 = arith.constant 0 : index
    %1 = vector.load %arg2[%c0_1, %c0_2] : memref<16x32xf32, #tpu.memory_space<vmem>>, vector<16x32xf32>
    %2 = arith.mulf %0, %1 : vector<16x32xf32>
    %c0_3 = arith.constant 0 : index
    %c0_4 = arith.constant 0 : index
    %3 = vector.load %arg4[%c0_3, %c0_4] : memref<32x64xf32, #tpu.memory_space<vmem>>, vector<32x64xf32>
    %cst = arith.constant dense<0.000000e+00> : vector<16x64xf32>
    %4 = tpu.matmul %2, %3, %cst {dimension_numbers = #tpu.dot_dimension_numbers<[1], [0], [0], [1], [0, 0, 1, 1], [], []>} : vector<16x32xf32>, vector<32x64xf32>, vector<16x64xf32> -> vector<16x64xf32>
    %c0_5 = arith.constant 0 : index
    %c0_6 = arith.constant 0 : index
    %5 = vector.load %arg5[%c0_5, %c0_6] : memref<1x64xf32, #tpu.memory_space<vmem>>, vector<1x64xf32>
    %6 = vector.broadcast %5 : vector<1x64xf32> to vector<16x64xf32>
    %7 = arith.addf %4, %6 : vector<16x64xf32>
    %cst_7 = arith.constant dense<0xFF800000> : vector<16xf32>
    %8 = vector.multi_reduction <maximumf>, %7, %cst_7 [1] : vector<16x64xf32> to vector<16xf32>
    %9 = vector.shape_cast %8 : vector<16xf32> to vector<16x1xf32>
    %10 = vector.broadcast %9 : vector<16x1xf32> to vector<16x64xf32>
    %11 = arith.subf %7, %10 : vector<16x64xf32>
    %12 = math.exp %11 : vector<16x64xf32>
    %cst_8 = arith.constant dense<0.000000e+00> : vector<16xf32>
    %13 = vector.multi_reduction <add>, %12, %cst_8 [1] : vector<16x64xf32> to vector<16xf32>
    %14 = vector.shape_cast %13 : vector<16xf32> to vector<16x1xf32>
    %15 = tpu.reciprocal %14 {approx = true} : vector<16x1xf32> -> vector<16x1xf32>
    %16 = arith.mulf %14, %15 : vector<16x1xf32>
    %cst_9 = arith.constant 2.000000e+00 : f32
    %17 = vector.broadcast %cst_9 : f32 to vector<16x1xf32>
    %18 = arith.subf %17, %16 : vector<16x1xf32>
    %19 = arith.mulf %15, %18 : vector<16x1xf32>
    %20 = vector.broadcast %19 : vector<16x1xf32> to vector<16x64xf32>
    %21 = arith.mulf %12, %20 : vector<16x64xf32>
    %c0_10 = arith.constant 0 : index
    %c0_11 = arith.constant 0 : index
    %22 = vector.load %arg3[%c0_10, %c0_11] : memref<16x64xf32, #tpu.memory_space<vmem>>, vector<16x64xf32>
    %23 = arith.mulf %21, %22 : vector<16x64xf32>
    %c0_12 = arith.constant 0 : index
    %c0_13 = arith.constant 0 : index
    %24 = vector.load %arg6[%c0_12, %c0_13] : memref<16x64xf32, #tpu.memory_space<vmem>>, vector<16x64xf32>
    tpu.vector_store %arg6[%c0_12, %c0_13], %23 {strides = array<i32>} : memref<16x64xf32, #tpu.memory_space<vmem>>, vector<16x64xf32>,
    return
  }
  func.func @transform_0(%arg0: i32) -> (i32, i32) {
    %c0_i32 = arith.constant 0 : i32
    %c0_i32_0 = arith.constant 0 : i32
    return %arg0, %c0_i32 : i32, i32
  }
  func.func @transform_1(%arg0: i32) -> (i32, i32) {
    %c0_i32 = arith.constant 0 : i32
    %c0_i32_0 = arith.constant 0 : i32
    return %arg0, %c0_i32 : i32, i32
  }
  func.func @transform_2(%arg0: i32) -> (i32, i32) {
    %c0_i32 = arith.constant 0 : i32
    %c0_i32_0 = arith.constant 0 : i32
    return %arg0, %c0_i32 : i32, i32
  }
  func.func @transform_3(%arg0: i32) -> (i32, i32) {
    %c0_i32 = arith.constant 0 : i32
    %c0_i32_0 = arith.constant 0 : i32
    %c0_i32_1 = arith.constant 0 : i32
    return %c0_i32, %c0_i32_0 : i32, i32
  }
  func.func @transform_4(%arg0: i32) -> (i32, i32) {
    %c0_i32 = arith.constant 0 : i32
    %c0_i32_0 = arith.constant 0 : i32
    %c0_i32_1 = arith.constant 0 : i32
    return %c0_i32, %c0_i32_0 : i32, i32
  }
  func.func @transform_5(%arg0: i32) -> (i32, i32) {
    %c0_i32 = arith.constant 0 : i32
    %c0_i32_0 = arith.constant 0 : i32
    return %arg0, %c0_i32 : i32, i32
  }
}

</mosaic_0001>

<llo_original>
// kernel: tpu_custom_call.1
$region0: #{tpu_custom_call.1}
  #allocation0 [shape = 'u32[]', space=smem, size = 0x4, offset = 0x4, fixed_abs, tag = 'smem constant byte address 0x4 - core index']
  #allocation1 [shape = 'u32[144,128]{1,0:T(1,128)}', space=vmem, size = 0x12000, scoped, tag = 'internal scratch']
  %s0 = inlined_call_operand.hbm [shape: f32[16,32], index: 0, kind: input, shape index: {}]
  %s1 = inlined_call_operand.hbm [shape: f32[16,32], index: 1, kind: input, shape index: {}]
  %s2 = inlined_call_operand.hbm [shape: f32[16,64], index: 2, kind: input, shape index: {}]
  %s3 = inlined_call_operand.hbm [shape: f32[32,64], index: 3, kind: input, shape index: {}]
  %s4 = inlined_call_operand.vmem [shape: f32[1,64], index: 4, kind: input, shape index: {}]
  %s5 = inlined_call_operand.hbm [shape: f32[16,64], index: 5, kind: output, shape index: {}]
  %s6 = sld [smem:[#allocation0]]
  $region46: #{tpu_custom_call.1} parent=0
    _
  %s8 = ssub.s32 1, %s6
  %s9 = scalar_select 0, %s8, %s6
  $region1: #{tpu_custom_call.1} parent=0
    #allocation2 [shape = 'u8[8192]{0}', space=vmem, size = 0x2000, scoped, tag = 'input window, operand 0, single buffered']
    #allocation3 [shape = 's32[1]{0}', space=sflag, size = 0x4, scoped, tag = 'scoped memory for tpu_custom_call.1']
    #allocation4 [shape = 's32[1]{0}', space=sflag, size = 0x4, scoped, tag = 'scoped memory for tpu_custom_call.1']
    #allocation5 [shape = 'u8[8192]{0}', space=vmem, size = 0x2000, scoped, tag = 'input window, operand 1, single buffered']
    #allocation6 [shape = 's32[1]{0}', space=sflag, size = 0x4, scoped, tag = 'scoped memory for tpu_custom_call.1']
    #allocation7 [shape = 'u8[8192]{0}', space=vmem, size = 0x2000, scoped, tag = 'input window, operand 2, single buffered']
    #allocation8 [shape = 'u8[16384]{0}', space=vmem, size = 0x4000, scoped, tag = 'input window, operand 3, single buffered']
    #allocation9 [shape = 's32[1]{0}', space=sflag, size = 0x4, scoped, tag = 'scoped memory for tpu_custom_call.1']
    #allocation10 [shape = 'u8[8192]{0}', space=vmem, size = 0x2000, scoped, tag = 'output window, operand 0, single buffered']
    %10 = vsyncpa [#allocation3], 0
    %11 = vsyncpa [#allocation6], 0
    %12 = vsyncpa [#allocation9], 0
    %13 = vsyncpa [#allocation4], 0
    // Predicated region
    $region2: #{tpu_custom_call.1} parent=1 // pred_check
      _
    $region3: #{tpu_custom_call.1} parent=1 // pred_check_branch
      %15 = sbr.rel (0) target = $region5
    $region4: #{tpu_custom_call.1} parent=1 // pred_region
      %s17 = ssub.s32 256, 256
      %18 = vsyncadd [#allocation3], %s17
      %s19 = sshll.u32 [#allocation2], 4
      %s20 = int_to_ptr.vmem [resolvable:$true] %s19
      %25 = dma.hbm_to_vmem [thread:$0]  %s0, 256, %s20, [#allocation3], 128, 128, 8
    $region5: #{tpu_custom_call.1} parent=1 // pred_fallthru
      _
    // Predicated region
    $region6: #{tpu_custom_call.1} parent=1 // pred_check
      _
    $region7: #{tpu_custom_call.1} parent=1 // pred_check_branch
      %27 = sbr.rel (0) target = $region9
    $region8: #{tpu_custom_call.1} parent=1 // pred_region
      %s29 = ssub.s32 256, 256
      %30 = vsyncadd [#allocation6], %s29
      %s31 = sshll.u32 [#allocation5], 4
      %s32 = int_to_ptr.vmem [resolvable:$true] %s31
      %37 = dma.hbm_to_vmem [thread:$0]  %s1, 256, %s32, [#allocation6], 128, 128, 8
    $region9: #{tpu_custom_call.1} parent=1 // pred_fallthru
      _
    // Predicated region
    $region10: #{tpu_custom_call.1} parent=1 // pred_check
      _
    $region11: #{tpu_custom_call.1} parent=1 // pred_check_branch
      %39 = sbr.rel (0) target = $region13
    $region12: #{tpu_custom_call.1} parent=1 // pred_region
      %s41 = ssub.s32 256, 256
      %42 = vsyncadd [#allocation6], %s41
      %s43 = sshll.u32 [#allocation7], 4
      %s44 = int_to_ptr.vmem [resolvable:$true] %s43
      %49 = dma.hbm_to_vmem [thread:$0]  %s2, 256, %s44, [#allocation6], 128, 128, 8
    $region13: #{tpu_custom_call.1} parent=1 // pred_fallthru
      _
    // Predicated region
    $region14: #{tpu_custom_call.1} parent=1 // pred_check
      _
    $region15: #{tpu_custom_call.1} parent=1 // pred_check_branch
      %51 = sbr.rel (0) target = $region17
    $region16: #{tpu_custom_call.1} parent=1 // pred_region
      %s53 = ssub.s32 512, 512
      %54 = vsyncadd [#allocation9], %s53
      %s55 = sshll.u32 [#allocation8], 4
      %s56 = int_to_ptr.vmem [resolvable:$true] %s55
      %61 = dma.hbm_to_vmem [thread:$0]  %s3, 512, %s56, [#allocation9], 128, 128, 8
    $region17: #{tpu_custom_call.1} parent=1 // pred_fallthru
      _
    // Predicated region
    $region18: #{tpu_custom_call.1} parent=1 // pred_check
      _
    $region19: #{tpu_custom_call.1} parent=1 // pred_check_branch
      %63 = sbr.rel (0) target = $region21
    $region20: #{tpu_custom_call.1} parent=1 // pred_region
      _
    $region21: #{tpu_custom_call.1} parent=1 // pred_fallthru
      _
    // Predicated region
    $region22: #{tpu_custom_call.1} parent=1 // pred_check
      _
    $region23: #{tpu_custom_call.1} parent=1 // pred_check_branch
      %65 = sbr.rel (0) target = $region25
    $region24: #{tpu_custom_call.1} parent=1 // pred_region
      %66 = dma.done [#allocation3], 256
    $region25: #{tpu_custom_call.1} parent=1 // pred_fallthru
      _
    // Predicated region
    $region26: #{tpu_custom_call.1} parent=1 // pred_check
      _
    $region27: #{tpu_custom_call.1} parent=1 // pred_check_branch
      %68 = sbr.rel (0) target = $region29
    $region28: #{tpu_custom_call.1} parent=1 // pred_region
      %69 = dma.done [#allocation6], 256
    $region29: #{tpu_custom_call.1} parent=1 // pred_fallthru
      _
    // Predicated region
    $region30: #{tpu_custom_call.1} parent=1 // pred_check
      _
    $region31: #{tpu_custom_call.1} parent=1 // pred_check_branch
      %71 = sbr.rel (0) target = $region33
    $region32: #{tpu_custom_call.1} parent=1 // pred_region
      %72 = dma.done [#allocation6], 256
    $region33: #{tpu_custom_call.1} parent=1 // pred_fallthru
      _
    // Predicated region
    $region34: #{tpu_custom_call.1} parent=1 // pred_check
      _
    $region35: #{tpu_custom_call.1} parent=1 // pred_check_branch
      %74 = sbr.rel (0) target = $region37
    $region36: #{tpu_custom_call.1} parent=1 // pred_region
      %75 = dma.done [#allocation9], 512
    $region37: #{tpu_custom_call.1} parent=1 // pred_fallthru
      _
    %v76 = vld [vmem:[#allocation2] sm:$0xff]
    %v77 = vld [vmem:[#allocation2 + $0x8] sm:$0xff]
    %v78 = vld [vmem:[#allocation5] sm:$0xff]
    %v79 = vld [vmem:[#allocation5 + $0x8] sm:$0xff]
    %v80 = vmul.f32 %v76, %v78
    %v81 = vmul.f32 %v77, %v79
    %v82 = vld [vmem:[#allocation8] sm:$0xff]
    %v83 = vld [vmem:[#allocation8 + $0x8] sm:$0xff]
    %v84 = vld [vmem:[#allocation8 + $0x10] sm:$0xff]
    %v85 = vld [vmem:[#allocation8 + $0x18] sm:$0xff]
    %v86 = vld [vmem:[%s4] sm:$0x1]
    %v88 = vlaneseq
    %v89 = vshrl.u32 %v88, 7
    %v90 = vsub.s32 0, %v89
    %v91 = vrot.slane %v86, %v90
    %vm93 = vcmask 261120
    %v95 = vsel %vm93, %v80, 0
    %v98 = vsel %vm93, %v81, 0
    %100 = vmatprep.subr.mxu0 0.0
    %101 = vmatpush1.msra.mxu0 %v82
    %102 = vmatprep.subr.mxu0 0.0
    %103 = vmatpush1.msra.mxu0 %v83
    %104 = vmatprep.subr.mxu0 0.0
    %105 = vmatpush1.msra.mxu0 %v84
    %106 = vmatprep.subr.mxu0 0.0
    %107 = vmatpush1.msra.mxu0 %v85
    %108 = vmatprep.subr.mxu0 0.0
    %109 = vmatpush1.msra.mxu0 0.0
    %110 = vmatprep.subr.mxu0 0.0
    %111 = vmatpush1.msra.mxu0 0.0
    %112 = vmatprep.subr.mxu0 0.0
    %113 = vmatpush1.msra.mxu0 0.0
    %114 = vmatprep.subr.mxu0 0.0
    %115 = vmatpush1.msra.mxu0 0.0
    %116 = vmatprep.subr.mxu0 0.0
    %117 = vmatpush1.msra.mxu0 0.0
    %118 = vmatprep.subr.mxu0 0.0
    %119 = vmatpush1.msra.mxu0 0.0
    %120 = vmatprep.subr.mxu0 0.0
    %121 = vmatpush1.msra.mxu0 0.0
    %122 = vmatprep.subr.mxu0 0.0
    %123 = vmatpush1.msra.mxu0 0.0
    %124 = vmatprep.subr.mxu0 0.0
    %125 = vmatpush1.msra.mxu0 0.0
    %126 = vmatprep.subr.mxu0 0.0
    %127 = vmatpush1.msra.mxu0 0.0
    %128 = vmatprep.subr.mxu0 0.0
    %129 = vmatpush1.msra.mxu0 0.0
    %130 = vmatprep.subr.mxu0 0.0
    %131 = vmatpush1.msra.mxu0 0.0
    %132 = vmatprep.subr.mxu0 0.0
    %133 = vmatpush1.msra.mxu0 0.0
    %134 = vmatprep.subr.mxu0 0.0
    %135 = vmatpush1.msra.mxu0 0.0
    %136 = vmatprep.subr.mxu0 0.0
    %137 = vmatpush1.msra.mxu0 0.0
    %138 = vmatprep.subr.mxu0 0.0
    %139 = vmatpush1.msra.mxu0 0.0
    %140 = vmatprep.subr.mxu0 0.0
    %141 = vmatpush1.msra.mxu0 0.0
    %142 = vmatprep.subr.mxu0 0.0
    %143 = vmatpush1.msra.mxu0 0.0
    %144 = vmatprep.subr.mxu0 0.0
    %145 = vmatpush1.msra.mxu0 0.0
    %146 = vmatprep.subr.mxu0 0.0
    %147 = vmatpush1.msra.mxu0 0.0
    %148 = vmatprep.subr.mxu0 0.0
    %149 = vmatpush1.msra.mxu0 0.0
    %150 = vmatprep.subr.mxu0 0.0
    %151 = vmatpush1.msra.mxu0 0.0
    %152 = vmatprep.subr.mxu0 0.0
    %153 = vmatpush1.msra.mxu0 0.0
    %154 = vmatprep.subr.mxu0 0.0
    %155 = vmatpush1.msra.mxu0 0.0
    %156 = vmatprep.subr.mxu0 0.0
    %157 = vmatpush1.msra.mxu0 0.0
    %158 = vmatprep.subr.mxu0 0.0
    %159 = vmatpush1.msra.mxu0 0.0
    %160 = vmatprep.subr.mxu0 0.0
    %161 = vmatpush1.msra.mxu0 0.0
    %162 = vmatprep.subr.mxu0 0.0
    %163 = vmatpush1.msra.mxu0 0.0
    %164 = vmatprep.mubr.f32.mxu0 0.0
    %165 = vmatmul.mubr.f32.gmra.mrb[0].mxu0 %v95
    %v166 = vpop.f32.mrb[0].mxu0
    %v167 = vadd.f32 %v91, %v166
    %v168 = vpop.f32.mrb[0].mxu0
    %169 = vmatprep.mubr.f32.mxu0 0.0
    %170 = vmatmul.mubr.f32.gmra.mrb[0].mxu0 %v98
    %v171 = vpop.f32.mrb[0].mxu0
    %v172 = vadd.f32 %v91, %v171
    %v173 = vpop.f32.mrb[0].mxu0
    %174 = vdwg.mxu0
    %vm175 = vcmask 523264
    %v176 = vsel %vm175, %v167, -inf
    %177 = vmax.xlane.f32.xlu0 %v176
    %v178 = vpop.xlane.xlu0 %177
    %v179 = vsel %vm175, %v172, -inf
    %180 = vmax.xlane.f32.xlu0 %v179
    %v181 = vpop.xlane.xlu0 %180
    %v182 = vsub.f32 %v167, %v178
    %v183 = vsub.f32 %v172, %v181
    %v184 = vmul.f32 %v182, 1.442695
    %v185 = vpow.pop %v184
    %v186 = vmul.f32 %v183, 1.442695
    %v187 = vpow.pop %v186
    %v188 = vsel %vm175, %v185, 0.0
    %189 = vadd.xlane.f32.xlu0 %v188
    %v190 = vpop.xlane.xlu0 %189
    %v191 = vsel %vm175, %v187, 0.0
    %192 = vadd.xlane.f32.xlu0 %v191
    %v193 = vpop.xlane.xlu0 %192
    %v194 = vrcp.pop %v190
    %v195 = vrcp.pop %v193
    %v196 = vmul.f32 %v190, %v194
    %v197 = vmul.f32 %v193, %v195
    %v198 = vsub.f32 2.0, %v196
    %v199 = vsub.f32 2.0, %v197
    %v200 = vmul.f32 %v194, %v198
    %v201 = vmul.f32 %v195, %v199
    %v202 = vmul.f32 %v185, %v200
    %v203 = vmul.f32 %v187, %v201
    %v204 = vld [vmem:[#allocation7] sm:$0xff]
    %v205 = vld [vmem:[#allocation7 + $0x8] sm:$0xff]
    %v206 = vmul.f32 %v202, %v204
    %v207 = vmul.f32 %v203, %v205
    %208 = vst.msk [vmem:[#allocation10] sm:$0xff] %vm175, %v206
    %209 = vst.msk [vmem:[#allocation10 + $0x8] sm:$0xff] %vm175, %v207
    // Predicated region
    $region38: #{tpu_custom_call.1} parent=1 // pred_check
      _
    $region39: #{tpu_custom_call.1} parent=1 // pred_check_branch
      %211 = sbr.rel (0) target = $region41
    $region40: #{tpu_custom_call.1} parent=1 // pred_region
      %s213 = ssub.s32 256, 256
      %214 = vsyncadd [#allocation4], %s213
      %s215 = sshll.u32 [#allocation10], 4
      %s216 = int_to_ptr.vmem [resolvable:$true] %s215
      %221 = dma.vmem_to_hbm [thread:$0]  %s216, 256, %s5, [#allocation4], 128, 128, 8
    $region41: #{tpu_custom_call.1} parent=1 // pred_fallthru
      _
    // Predicated region
    $region42: #{tpu_custom_call.1} parent=1 // pred_check
      _
    $region43: #{tpu_custom_call.1} parent=1 // pred_check_branch
      %223 = sbr.rel (0) target = $region45
    $region44: #{tpu_custom_call.1} parent=1 // pred_region
      %224 = dma.done [#allocation4], 256
    $region45: #{tpu_custom_call.1} parent=1 // pred_fallthru
      _
    %225 = vsyncpa [#allocation3], 1
    %226 = vsyncpa [#allocation6], 1
    %227 = vsyncpa [#allocation9], 1
    %228 = vsyncpa [#allocation4], 1

</llo_original>
